<compile_context>
chip_gen: v6e
topology: v6e:2x2x1
jax: 0.10.0
libtpu: 0.0.40
codegen_flags: <defaults>
</compile_context>

<pallas_src>
import jax
import jax.numpy as jnp
from jax.experimental import pallas as pl
from jax.experimental.pallas import tpu as pltpu

LANE = 128
SUBLANE = 8


def _round_up(n, m):
    return ((n + m - 1) // m) * m


def house_mlp_kernel(x_ref, w_ref, b_ref, o_ref):
    # Single fused Linear on the MXU: y = x @ W_eff + b_eff (f32 accumulation).
    o_ref[...] = (
        jnp.dot(x_ref[...], w_ref[...], preferred_element_type=jnp.float32)
        + b_ref[...]
    ).astype(o_ref.dtype)


def house_model_forward(x, params, *, tile_b=8192):
    """x: (batch, feature) f32. params: (in,out) weights, (1,out) biases."""
    w1, b1 = params["w1"], params["b1"]
    w2, b2 = params["w2"], params["b2"]
    w3, b3 = params["w3"], params["b3"]

    # Collapse the affine chain once, outside the kernel (mathematically exact).
    w_eff = w1 @ w2 @ w3                                # (feature, out)
    b_eff = (b1 @ w2 + b2) @ w3 + b3                    # (1, out)

    batch, feature = x.shape
    out_dim = w_eff.shape[1]

    # Lane-dense output: pad out dim to a multiple of 128.
    out_pad = _round_up(out_dim, LANE)
    # Batch tile: multiple of 8, no larger than the (padded) batch.
    tile = min(tile_b, _round_up(batch, SUBLANE))
    tile = _round_up(tile, SUBLANE)
    batch_pad = _round_up(batch, tile)

    x_p = x
    if batch_pad != batch:
        x_p = jnp.pad(x, ((0, batch_pad - batch), (0, 0)))
    w_p = jnp.pad(w_eff, ((0, 0), (0, out_pad - out_dim)))
    b_p = jnp.pad(b_eff, ((0, 0), (0, out_pad - out_dim)))

    grid = (batch_pad // tile,)

    cost = pl.CostEstimate(
        flops=2 * batch_pad * feature * out_pad,
        transcendentals=0,
        bytes_accessed=4 * (batch_pad * feature + feature * out_pad
                            + out_pad + batch_pad * out_pad),
    )

    out_padded = pl.pallas_call(
        house_mlp_kernel,
        out_shape=jax.ShapeDtypeStruct((batch_pad, out_pad), jnp.float32),
        grid=grid,
        in_specs=[
            pl.BlockSpec((tile, feature), lambda i: (i, 0)),     # x: streamed
            pl.BlockSpec((feature, out_pad), lambda i: (0, 0)),  # W_eff: resident
            pl.BlockSpec((1, out_pad), lambda i: (0, 0)),        # b_eff: resident
        ],
        out_specs=pl.BlockSpec((tile, out_pad), lambda i: (i, 0)),
        compiler_params=pltpu.CompilerParams(
            dimension_semantics=("parallel",),
            vmem_limit_bytes=32 * 1024 * 1024,
        ),
        cost_estimate=cost,
    )(x_p, w_p, b_p)

    return out_padded[:batch, :out_dim]


def init_params(key, feature, output):
    """Deterministic synthetic parameters matching torch.nn.Linear shapes.

    PyTorch stores Linear weight as (out, in); we store the transposed (in, out)
    layout so the kernel can do x @ W directly.
    """
    ks = jax.random.split(key, 6)

    def lin(kw, kb, fan_in, fan_out):
        bound = 1.0 / jnp.sqrt(fan_in)
        w = jax.random.uniform(kw, (fan_in, fan_out), jnp.float32, -bound, bound)
        b = jax.random.uniform(kb, (1, fan_out), jnp.float32, -bound, bound)
        return w, b

    w1, b1 = lin(ks[0], ks[1], feature, 10)
    w2, b2 = lin(ks[2], ks[3], 10, 15)
    w3, b3 = lin(ks[4], ks[5], 15, output)
    return {"w1": w1, "b1": b1, "w2": w2, "b2": b2, "w3": w3, "b3": b3}


def reference_forward(x, p):
    h1 = x @ p["w1"] + p["b1"]
    h2 = h1 @ p["w2"] + p["b2"]
    # Dropout(0.2): identity in eval mode.
    return h2 @ p["w3"] + p["b3"]


if __name__ == "__main__":
    key = jax.random.PRNGKey(0)
    k_x, k_p = jax.random.split(key)

    batch, feature, output = 8, 8, 4
    x = jax.random.normal(k_x, (batch, feature), dtype=jnp.float32)
    params = init_params(k_p, feature, output)

    out = house_model_forward(x, params)
    jax.block_until_ready(out)

    ref = reference_forward(x, params)
    assert out.shape == (batch, output)
    assert jnp.allclose(out, ref, atol=1e-4, rtol=1e-4), (
        f"max abs err {jnp.max(jnp.abs(out - ref))}")

    print("KERNEL_OK")
</pallas_src>

<mosaic_0001>
module attributes {stable_mosaic.version = 11 : i64} {
  func.func @house_mlp_kernel(%arg0: i32, %arg1: memref<8x8xf32, #tpu.memory_space<vmem>>, %arg2: memref<8x128xf32, #tpu.memory_space<vmem>>, %arg3: memref<1x128xf32, #tpu.memory_space<vmem>>, %arg4: memref<8x128xf32, #tpu.memory_space<vmem>>) attributes {dimension_semantics = [#tpu.dimension_semantics<parallel>], iteration_bounds = array<i64: 1>, scalar_prefetch = 0 : i64, scratch_operands = 0 : i64, tpu.core_type = #tpu.core_type<tc>, window_params = [{transform_indices = @transform_0, window_bounds = array<i64: 8, 8>}, {pipeline_mode = #tpu.pipeline_mode<synchronous>, transform_indices = @transform_1, window_bounds = array<i64: 8, 128>}, {pipeline_mode = #tpu.pipeline_mode<synchronous>, transform_indices = @transform_2, window_bounds = array<i64: 1, 128>}, {transform_indices = @transform_3, window_bounds = array<i64: 8, 128>}]} {
    %c0 = arith.constant 0 : index
    %c0_0 = arith.constant 0 : index
    %0 = vector.load %arg1[%c0, %c0_0] : memref<8x8xf32, #tpu.memory_space<vmem>>, vector<8x8xf32>
    %c0_1 = arith.constant 0 : index
    %c0_2 = arith.constant 0 : index
    %1 = vector.load %arg2[%c0_1, %c0_2] : memref<8x128xf32, #tpu.memory_space<vmem>>, vector<8x128xf32>
    %cst = arith.constant dense<0.000000e+00> : vector<8x128xf32>
    %2 = tpu.matmul %0, %1, %cst {dimension_numbers = #tpu.dot_dimension_numbers<[1], [0], [0], [1], [0, 0, 1, 1], [], []>} : vector<8x8xf32>, vector<8x128xf32>, vector<8x128xf32> -> vector<8x128xf32>
    %c0_3 = arith.constant 0 : index
    %c0_4 = arith.constant 0 : index
    %3 = vector.load %arg3[%c0_3, %c0_4] : memref<1x128xf32, #tpu.memory_space<vmem>>, vector<1x128xf32>
    %4 = vector.broadcast %3 : vector<1x128xf32> to vector<8x128xf32>
    %5 = arith.addf %2, %4 : vector<8x128xf32>
    %c0_5 = arith.constant 0 : index
    %c0_6 = arith.constant 0 : index
    %6 = vector.load %arg4[%c0_5, %c0_6] : memref<8x128xf32, #tpu.memory_space<vmem>>, vector<8x128xf32>
    tpu.vector_store %arg4[%c0_5, %c0_6], %5 {strides = array<i32>} : memref<8x128xf32, #tpu.memory_space<vmem>>, vector<8x128xf32>,
    return
  }
  func.func @transform_0(%arg0: i32) -> (i32, i32) {
    %c0_i32 = arith.constant 0 : i32
    %c0_i32_0 = arith.constant 0 : i32
    return %arg0, %c0_i32 : i32, i32
  }
  func.func @transform_1(%arg0: i32) -> (i32, i32) {
    %c0_i32 = arith.constant 0 : i32
    %c0_i32_0 = arith.constant 0 : i32
    %c0_i32_1 = arith.constant 0 : i32
    return %c0_i32, %c0_i32_0 : i32, i32
  }
  func.func @transform_2(%arg0: i32) -> (i32, i32) {
    %c0_i32 = arith.constant 0 : i32
    %c0_i32_0 = arith.constant 0 : i32
    %c0_i32_1 = arith.constant 0 : i32
    return %c0_i32, %c0_i32_0 : i32, i32
  }
  func.func @transform_3(%arg0: i32) -> (i32, i32) {
    %c0_i32 = arith.constant 0 : i32
    %c0_i32_0 = arith.constant 0 : i32
    return %arg0, %c0_i32 : i32, i32
  }
}

</mosaic_0001>

<llo_original>
// kernel: tpu_custom_call.1
$region0: #{tpu_custom_call.1}
  #allocation0 [shape = 'u32[]', space=smem, size = 0x4, offset = 0x4, fixed_abs, tag = 'smem constant byte address 0x4 - core index']
  #allocation1 [shape = 'u32[144,128]{1,0:T(1,128)}', space=vmem, size = 0x12000, scoped, tag = 'internal scratch']
  %s0 = inlined_call_operand.hbm [shape: f32[8,8], index: 0, kind: input, shape index: {}]
  %s1 = inlined_call_operand.hbm [shape: f32[8,128], index: 1, kind: input, shape index: {}]
  %s2 = inlined_call_operand.vmem [shape: f32[1,128], index: 2, kind: input, shape index: {}]
  %s3 = inlined_call_operand.hbm [shape: f32[8,128], index: 3, kind: output, shape index: {}]
  %s4 = sld [smem:[#allocation0]]
  $region30: #{tpu_custom_call.1} parent=0
    _
  %s6 = ssub.s32 1, %s4
  %s7 = scalar_select 0, %s6, %s4
  $region1: #{tpu_custom_call.1} parent=0
    #allocation2 [shape = 'u8[4096]{0}', space=vmem, size = 0x1000, scoped, tag = 'input window, operand 0, single buffered']
    #allocation3 [shape = 's32[1]{0}', space=sflag, size = 0x4, scoped, tag = 'scoped memory for tpu_custom_call.1']
    #allocation4 [shape = 's32[1]{0}', space=sflag, size = 0x4, scoped, tag = 'scoped memory for tpu_custom_call.1']
    #allocation5 [shape = 'u8[4096]{0}', space=vmem, size = 0x1000, scoped, tag = 'input window, operand 1, single buffered']
    #allocation6 [shape = 's32[1]{0}', space=sflag, size = 0x4, scoped, tag = 'scoped memory for tpu_custom_call.1']
    #allocation7 [shape = 'u8[4096]{0}', space=vmem, size = 0x1000, scoped, tag = 'output window, operand 0, single buffered']
    %8 = vsyncpa [#allocation3], 0
    %9 = vsyncpa [#allocation6], 0
    %10 = vsyncpa [#allocation4], 0
    // Predicated region
    $region2: #{tpu_custom_call.1} parent=1 // pred_check
      _
    $region3: #{tpu_custom_call.1} parent=1 // pred_check_branch
      %12 = sbr.rel (0) target = $region5
    $region4: #{tpu_custom_call.1} parent=1 // pred_region
      %s14 = ssub.s32 128, 128
      %15 = vsyncadd [#allocation3], %s14
      %s17 = sshll.u32 [#allocation2], 4
      %s18 = int_to_ptr.vmem [resolvable:$true] %s17
      %20 = dma.hbm_to_vmem [thread:$0]  %s0, 128, %s18, [#allocation3]
    $region5: #{tpu_custom_call.1} parent=1 // pred_fallthru
      _
    // Predicated region
    $region6: #{tpu_custom_call.1} parent=1 // pred_check
      _
    $region7: #{tpu_custom_call.1} parent=1 // pred_check_branch
      %22 = sbr.rel (0) target = $region9
    $region8: #{tpu_custom_call.1} parent=1 // pred_region
      %s24 = ssub.s32 128, 128
      %25 = vsyncadd [#allocation6], %s24
      %s27 = sshll.u32 [#allocation5], 4
      %s28 = int_to_ptr.vmem [resolvable:$true] %s27
      %30 = dma.hbm_to_vmem [thread:$0]  %s1, 128, %s28, [#allocation6]
    $region9: #{tpu_custom_call.1} parent=1 // pred_fallthru
      _
    // Predicated region
    $region10: #{tpu_custom_call.1} parent=1 // pred_check
      _
    $region11: #{tpu_custom_call.1} parent=1 // pred_check_branch
      %32 = sbr.rel (0) target = $region13
    $region12: #{tpu_custom_call.1} parent=1 // pred_region
      _
    $region13: #{tpu_custom_call.1} parent=1 // pred_fallthru
      _
    // Predicated region
    $region14: #{tpu_custom_call.1} parent=1 // pred_check
      _
    $region15: #{tpu_custom_call.1} parent=1 // pred_check_branch
      %34 = sbr.rel (0) target = $region17
    $region16: #{tpu_custom_call.1} parent=1 // pred_region
      %35 = dma.done [#allocation3], 128
    $region17: #{tpu_custom_call.1} parent=1 // pred_fallthru
      _
    // Predicated region
    $region18: #{tpu_custom_call.1} parent=1 // pred_check
      _
    $region19: #{tpu_custom_call.1} parent=1 // pred_check_branch
      %37 = sbr.rel (0) target = $region21
    $region20: #{tpu_custom_call.1} parent=1 // pred_region
      %38 = dma.done [#allocation6], 128
    $region21: #{tpu_custom_call.1} parent=1 // pred_fallthru
      _
    %v39 = vld [vmem:[#allocation2] sm:$0xff]
    %v40 = vld [vmem:[#allocation5] sm:$0xff]
    %v41 = vld [vmem:[%s2] sm:$0x1]
    %v43 = vlaneseq
    %v44 = vshrl.u32 %v43, 7
    %v45 = vsub.s32 0, %v44
    %v46 = vrot.slane %v41, %v45
    %vm48 = vcmask 64512
    %v50 = vsel %vm48, %v39, 0
    %52 = vmatprep.subr.mxu0 0.0
    %53 = vmatpush1.msra.mxu0 0.0
    %54 = vmatprep.subr.mxu0 0.0
    %55 = vmatpush1.msra.mxu0 0.0
    %56 = vmatprep.subr.mxu0 0.0
    %57 = vmatpush1.msra.mxu0 0.0
    %58 = vmatprep.subr.mxu0 0.0
    %59 = vmatpush1.msra.mxu0 0.0
    %60 = vmatprep.subr.mxu0 0.0
    %61 = vmatpush1.msra.mxu0 0.0
    %62 = vmatprep.subr.mxu0 0.0
    %63 = vmatpush1.msra.mxu0 0.0
    %64 = vmatprep.subr.mxu0 0.0
    %65 = vmatpush1.msra.mxu0 0.0
    %66 = vmatprep.subr.mxu0 0.0
    %67 = vmatpush1.msra.mxu0 0.0
    %68 = vmatprep.subr.mxu0 0.0
    %69 = vmatpush1.msra.mxu0 0.0
    %70 = vmatprep.subr.mxu0 0.0
    %71 = vmatpush1.msra.mxu0 0.0
    %72 = vmatprep.subr.mxu0 0.0
    %73 = vmatpush1.msra.mxu0 0.0
    %74 = vmatprep.subr.mxu0 0.0
    %75 = vmatpush1.msra.mxu0 0.0
    %76 = vmatprep.subr.mxu0 0.0
    %77 = vmatpush1.msra.mxu0 0.0
    %78 = vmatprep.subr.mxu0 0.0
    %79 = vmatpush1.msra.mxu0 0.0
    %80 = vmatprep.subr.mxu0 0.0
    %81 = vmatpush1.msra.mxu0 0.0
    %82 = vmatprep.subr.mxu0 0.0
    %83 = vmatpush1.msra.mxu0 %v40
    %84 = vmatprep.subr.mxu0 0.0
    %85 = vmatpush2.msra.mxu0 0.0
    %86 = vmatprep.subr.mxu0 0.0
    %87 = vmatpush2.msra.mxu0 0.0
    %88 = vmatprep.subr.mxu0 0.0
    %89 = vmatpush2.msra.mxu0 0.0
    %90 = vmatprep.subr.mxu0 0.0
    %91 = vmatpush2.msra.mxu0 0.0
    %92 = vmatprep.subr.mxu0 0.0
    %93 = vmatpush2.msra.mxu0 0.0
    %94 = vmatprep.subr.mxu0 0.0
    %95 = vmatpush2.msra.mxu0 0.0
    %96 = vmatprep.subr.mxu0 0.0
    %97 = vmatpush2.msra.mxu0 0.0
    %98 = vmatprep.subr.mxu0 0.0
    %99 = vmatpush2.msra.mxu0 0.0
    %100 = vmatprep.subr.mxu0 0.0
    %101 = vmatpush2.msra.mxu0 0.0
    %102 = vmatprep.subr.mxu0 0.0
    %103 = vmatpush2.msra.mxu0 0.0
    %104 = vmatprep.subr.mxu0 0.0
    %105 = vmatpush2.msra.mxu0 0.0
    %106 = vmatprep.subr.mxu0 0.0
    %107 = vmatpush2.msra.mxu0 0.0
    %108 = vmatprep.subr.mxu0 0.0
    %109 = vmatpush2.msra.mxu0 0.0
    %110 = vmatprep.subr.mxu0 0.0
    %111 = vmatpush2.msra.mxu0 0.0
    %112 = vmatprep.subr.mxu0 0.0
    %113 = vmatpush2.msra.mxu0 0.0
    %114 = vmatprep.subr.mxu0 0.0
    %115 = vmatpush2.msra.mxu0 0.0
    %116 = vmatprep.mubr.f32.mxu0 0.0
    %117 = vmatmul.mubr.f32.gmra.mxu0 %v50
    %v118 = vpop.f32.mrf.mxu0
    %v119 = vadd.f32 %v46, %v118
    %v120 = vpop.f32.mrf.mxu0
    %121 = vdwg.mxu0
    %122 = vst [vmem:[#allocation7] sm:$0xff] %v119
    // Predicated region
    $region22: #{tpu_custom_call.1} parent=1 // pred_check
      _
    $region23: #{tpu_custom_call.1} parent=1 // pred_check_branch
      %124 = sbr.rel (0) target = $region25
    $region24: #{tpu_custom_call.1} parent=1 // pred_region
      %s126 = ssub.s32 128, 128
      %127 = vsyncadd [#allocation4], %s126
      %s129 = sshll.u32 [#allocation7], 4
      %s130 = int_to_ptr.vmem [resolvable:$true] %s129
      %132 = dma.vmem_to_hbm [thread:$0]  %s130, 128, %s3, [#allocation4]
    $region25: #{tpu_custom_call.1} parent=1 // pred_fallthru
      _
    // Predicated region
    $region26: #{tpu_custom_call.1} parent=1 // pred_check
      _
    $region27: #{tpu_custom_call.1} parent=1 // pred_check_branch
      %134 = sbr.rel (0) target = $region29
    $region28: #{tpu_custom_call.1} parent=1 // pred_region
      %135 = dma.done [#allocation4], 128
    $region29: #{tpu_custom_call.1} parent=1 // pred_fallthru
      _
    %136 = vsyncpa [#allocation3], 1
    %137 = vsyncpa [#allocation6], 1
    %138 = vsyncpa [#allocation4], 1

</llo_original>
